<compile_context>
chip_gen: v7x
topology: tpu7x:2x2x1
jax: 0.10.0
libtpu: 0.0.40
codegen_flags: <defaults>
</compile_context>

<pallas_src>
import jax
import jax.numpy as jnp
from jax.experimental import pallas as pl
from jax.experimental.pallas import tpu as pltpu


# ----------------------------- Pass 1: stats ---------------------------------
def _stats_kernel_1d(x_ref, mean_ref, m2_ref, min_ref, max_ref):
    # Full-width rows: the block covers the whole reduction axis, so per-row
    # stats use a numerically robust two-pass (mean first, then centered M2).
    x = x_ref[...].astype(jnp.float32)
    mu = jnp.mean(x, axis=1, keepdims=True)
    d = x - mu
    mean_ref[...] = mu
    m2_ref[...] = jnp.sum(d * d, axis=1, keepdims=True)
    min_ref[...] = jnp.min(x, axis=1, keepdims=True)
    max_ref[...] = jnp.max(x, axis=1, keepdims=True)


def _stats_kernel_2d(x_ref, mean_ref, m2_ref, min_ref, max_ref):
    # Lane-tiled fallback for very large H*W: per-tile (mean, M2) merged across
    # the "arbitrary" lane axis with Chan's parallel-variance update.
    j = pl.program_id(1)
    x = x_ref[...].astype(jnp.float32)
    n_b = jnp.float32(x.shape[1])
    mu_b = jnp.mean(x, axis=1, keepdims=True)
    d = x - mu_b
    m2_b = jnp.sum(d * d, axis=1, keepdims=True)
    pmin = jnp.min(x, axis=1, keepdims=True)
    pmax = jnp.max(x, axis=1, keepdims=True)

    @pl.when(j == 0)
    def _():
        mean_ref[...] = mu_b
        m2_ref[...] = m2_b
        min_ref[...] = pmin
        max_ref[...] = pmax

    @pl.when(j > 0)
    def _():
        n_a = n_b * j.astype(jnp.float32)
        n_ab = n_a + n_b
        w_b = n_b / n_ab
        delta = mu_b - mean_ref[...]
        mean_ref[...] = mean_ref[...] + delta * w_b
        m2_ref[...] = m2_ref[...] + m2_b + (delta * delta) * (n_a * w_b)
        min_ref[...] = jnp.minimum(min_ref[...], pmin)
        max_ref[...] = jnp.maximum(max_ref[...], pmax)


# ----------------------------- Pass 2: apply ----------------------------------
def _apply_kernel(x_ref, a_ref, b_ref, o_ref):
    # out = a_row * x + b_row ; a/b are (row_tile, 1) f32 broadcast over lanes.
    xf = x_ref[...].astype(jnp.float32)
    o_ref[...] = (xf * a_ref[...] + b_ref[...]).astype(o_ref.dtype)


# ----------------------------- tiling helpers ---------------------------------
def _divisor_tile(dim, unit, cap):
    """Largest multiple of `unit` that divides `dim` and is <= cap; None if none."""
    if dim % unit != 0:
        return None
    t = min(cap, dim)
    t = (t // unit) * unit
    while t >= unit:
        if dim % t == 0:
            return t
        t -= unit
    return None


def _vmem_budget_bytes():
    """Chip-aware scoped-VMEM budget (conservative default = 48 MiB for v7x)."""
    cap = None
    try:
        cap = getattr(pltpu.get_tpu_info(), "vmem_capacity_bytes", None)
    except Exception:
        cap = None
    if not cap:
        cap = 64 * 1024 * 1024            # v7x per-TC physical VMEM
    return int(min(max(cap * 3 // 4, 32 * 1024 * 1024), 96 * 1024 * 1024))


def _choose_tiles(rows, cols, itemsize, target_bytes):
    """Pick (row_tile, lane_tile) for the streamed (rows, cols) layout."""
    pack = max(1, 4 // max(itemsize, 1))
    row_unit = 8 * pack                    # dtype-aware sublane packing unit

    # Preferred: full-width lane tiles (contiguous DMA, 1-D grid, no accumulate).
    row_budget = max(1, target_bytes // max(cols * itemsize, 1))
    for unit in (row_unit, 8):
        rt = _divisor_tile(rows, unit, max(row_budget, unit))
        if rt is not None and rt * cols * itemsize <= 2 * target_bytes:
            return rt, cols
    if rows * cols * itemsize <= 2 * target_bytes:
        return rows, cols                  # small array: one block covers it

    # Fallback: narrow row strips, lane-tiled reduction axis.
    if rows % row_unit == 0:
        rt = row_unit
    elif rows % 8 == 0:
        rt = 8
    else:
        rt = rows
    lane_budget = max(128, target_bytes // max(rt * itemsize, 1))
    lt = _divisor_tile(cols, 128, lane_budget)
    if lt is None:
        lt = cols   # awkward H*W with no /128 divisor; rely on VMEM headroom
    return rt, lt


def _tensorcores_per_chip():
    try:
        kind = jax.devices()[0].device_kind.lower()
    except Exception:
        return 1
    return 2 if "v7" in kind else 1        # v7x packages 2 TensorCores per chip


# ----------------------------- wrapper -----------------------------------------
def rcs_normalize(t):
    """t = (x, y); x is NCHW.  Returns (normalized_x, y) matching RcsNormalize.

    Degenerate inputs (constant x, zero-variance channel, N*H*W == 1) give
    NaN/Inf, mirroring the PyTorch module.
    """
    x, y = t
    n, c, h, w = x.shape
    rows, cols = n * c, h * w

    # Native flatten: NCHW -> (N*C, H*W). Pure reshape, no transpose / HBM pass.
    x2d = x.reshape(rows, cols)

    vmem_limit = _vmem_budget_bytes()
    # ~4-16 MiB streamed blocks amortize the per-grid-step overhead while keeping
    # double-buffered in+out blocks of pass 2 (~4x block bytes) inside the budget.
    target_block = max(4 * 1024 * 1024, min(16 * 1024 * 1024, vmem_limit // 6))
    rt, lt = _choose_tiles(rows, cols, x.dtype.itemsize, target_block)
    full_width = (lt == cols)
    n_row_blocks = rows // rt

    row_sem_try = []
    if _tensorcores_per_chip() > 1 and n_row_blocks >= 2:
        row_sem_try.append(pltpu.CORE_PARALLEL)   # shard row blocks across the 2 TCs
    row_sem_try.append(pltpu.PARALLEL)

    def _build(row_sem):
        if full_width:
            grid = (n_row_blocks,)
            x_spec = pl.BlockSpec((rt, cols), lambda i: (i, 0))
            col_spec = pl.BlockSpec((rt, 1), lambda i: (i, 0))
            sem1 = (row_sem,)
            sem2 = (row_sem,)
            stats_kernel = _stats_kernel_1d
        else:
            grid = (n_row_blocks, cols // lt)
            x_spec = pl.BlockSpec((rt, lt), lambda i, j: (i, j))
            col_spec = pl.BlockSpec((rt, 1), lambda i, j: (i, 0))
            sem1 = (row_sem, pltpu.ARBITRARY)     # reduction axis last
            sem2 = (row_sem, pltpu.PARALLEL)
            stats_kernel = _stats_kernel_2d
        return grid, x_spec, col_spec, sem1, sem2, stats_kernel

    def _run(row_sem):
        grid, x_spec, col_spec, sem1, sem2, stats_kernel = _build(row_sem)
        stat_shape = jax.ShapeDtypeStruct((rows, 1), jnp.float32)

        # ---- Pass 1: per-row (= per (n, c)) mean / M2 / min / max -------------
        means, m2s, mins, maxs = pl.pallas_call(
            stats_kernel,
            out_shape=(stat_shape,) * 4,
            grid=grid,
            in_specs=[x_spec],
            out_specs=(col_spec,) * 4,
            compiler_params=pltpu.CompilerParams(
                dimension_semantics=sem1, vmem_limit_bytes=vmem_limit),
        )(x2d)

        # ---- Tiny scalar epilogue: fold everything into per-channel affine ----
        mean_rows = means.reshape(n, c)           # (N, C)
        m2_rows = m2s.reshape(n, c)
        min_c = mins.reshape(n, c).min(axis=0)    # raw per-channel min/max
        max_c = maxs.reshape(n, c).max(axis=0)

        # Chan merge of N equal-count per-(n,c) partials into per-channel stats:
        # well-conditioned unbiased variance (torch divisor N*H*W - 1).
        mean_c = mean_rows.mean(axis=0)
        m2_c = m2_rows.sum(axis=0) + cols * jnp.sum(
            (mean_rows - mean_c[None, :]) ** 2, axis=0)
        m_elems = n * cols
        std_c = jnp.sqrt(m2_c / (m_elems - 1))

        # First global min-max cancels inside the per-channel normalize; final
        # global min/max come from raw per-channel min/max under the monotone
        # (std_c > 0) affine map.
        min2 = ((min_c - mean_c) / std_c).min()
        max2 = ((max_c - mean_c) / std_c).max()
        inv_r2 = 1.0 / (max2 - min2)
        a_c = inv_r2 / std_c                      # (C,)
        b_c = -mean_c * a_c - min2 * inv_r2       # (C,)

        # Per-row coefficient columns (row r -> channel r % C); tiny (N*C, 1).
        a_rows = jnp.tile(a_c, n).reshape(rows, 1).astype(jnp.float32)
        b_rows = jnp.tile(b_c, n).reshape(rows, 1).astype(jnp.float32)

        # ---- Pass 2: streamed fused-affine apply (1 FMA / element) ------------
        # (input_output_aliases intentionally omitted: x2d is not donated here,
        #  aliasing a live input would force an extra XLA copy.)
        return pl.pallas_call(
            _apply_kernel,
            out_shape=jax.ShapeDtypeStruct((rows, cols), x.dtype),
            grid=grid,
            in_specs=[x_spec, col_spec, col_spec],
            out_specs=x_spec,
            compiler_params=pltpu.CompilerParams(
                dimension_semantics=sem2, vmem_limit_bytes=vmem_limit),
        )(x2d, a_rows, b_rows)

    out2d = None
    last_err = None
    for row_sem in row_sem_try:
        try:
            out2d = _run(row_sem)
            break
        except Exception as e:     # CORE_PARALLEL unsupported -> plain parallel
            last_err = e
    if out2d is None:
        raise last_err

    return (out2d.reshape(n, c, h, w), y)


# ----------------------------- reference ---------------------------------------
def _reference(t):
    """Pure-jnp reference mirroring the PyTorch module."""
    x, y = t
    x = x.astype(jnp.float32)
    x = (x - x.min()) / (x.max() - x.min())
    mean = x.mean(axis=(0, 2, 3), keepdims=True)
    n_elems = x.shape[0] * x.shape[2] * x.shape[3]
    var = ((x - mean) ** 2).sum(axis=(0, 2, 3), keepdims=True) / (n_elems - 1)
    std = jnp.sqrt(var)
    x = (x - mean) / std
    x = (x - x.min()) / (x.max() - x.min())
    return (x, y)


if __name__ == "__main__":
    key = jax.random.PRNGKey(0)
    kx, ky = jax.random.split(key)
    x = jax.random.normal(kx, (2, 4, 16, 16), dtype=jnp.float32) * 3.0 + 1.5
    y = jax.random.randint(ky, (2,), 0, 10)

    out_x, out_y = rcs_normalize((x, y))
    out_x = jax.block_until_ready(out_x)

    ref_x, _ = _reference((x, y))
    assert out_x.shape == x.shape and out_x.dtype == x.dtype
    assert jnp.allclose(out_x, ref_x, atol=5e-5, rtol=1e-5)
    assert jnp.array_equal(out_y, y)

    print("KERNEL_OK")
</pallas_src>

<mosaic_0001>
module attributes {stable_mosaic.version = 11 : i64} {
  func.func @_stats_kernel_1d(%arg0: i32, %arg1: memref<8x256xf32, #tpu.memory_space<vmem>>, %arg2: memref<8x1xf32, #tpu.memory_space<vmem>>, %arg3: memref<8x1xf32, #tpu.memory_space<vmem>>, %arg4: memref<8x1xf32, #tpu.memory_space<vmem>>, %arg5: memref<8x1xf32, #tpu.memory_space<vmem>>) attributes {dimension_semantics = [#tpu.dimension_semantics<parallel>], iteration_bounds = array<i64: 1>, scalar_prefetch = 0 : i64, scratch_operands = 0 : i64, tpu.core_type = #tpu.core_type<tc>, window_params = [{transform_indices = @transform_0, window_bounds = array<i64: 8, 256>}, {transform_indices = @transform_1, window_bounds = array<i64: 8, 1>}, {transform_indices = @transform_2, window_bounds = array<i64: 8, 1>}, {transform_indices = @transform_3, window_bounds = array<i64: 8, 1>}, {transform_indices = @transform_4, window_bounds = array<i64: 8, 1>}]} {
    %c0 = arith.constant 0 : index
    %c0_0 = arith.constant 0 : index
    %0 = vector.load %arg1[%c0, %c0_0] : memref<8x256xf32, #tpu.memory_space<vmem>>, vector<8x256xf32>
    %cst = arith.constant dense<0.000000e+00> : vector<8xf32>
    %1 = vector.multi_reduction <add>, %0, %cst [1] : vector<8x256xf32> to vector<8xf32>
    %2 = vector.shape_cast %1 : vector<8xf32> to vector<8x1xf32>
    %cst_1 = arith.constant 2.560000e+02 : f32
    %3 = vector.broadcast %cst_1 : f32 to vector<8x1xf32>
    %4 = arith.divf %2, %3 : vector<8x1xf32>
    %5 = vector.broadcast %4 : vector<8x1xf32> to vector<8x256xf32>
    %6 = arith.subf %0, %5 : vector<8x256xf32>
    %c0_2 = arith.constant 0 : index
    %c0_3 = arith.constant 0 : index
    %7 = vector.load %arg2[%c0_2, %c0_3] : memref<8x1xf32, #tpu.memory_space<vmem>>, vector<8x1xf32>
    tpu.vector_store %arg2[%c0_2, %c0_3], %4 {strides = array<i32>} : memref<8x1xf32, #tpu.memory_space<vmem>>, vector<8x1xf32>,
    %8 = arith.mulf %6, %6 : vector<8x256xf32>
    %cst_4 = arith.constant dense<0.000000e+00> : vector<8xf32>
    %9 = vector.multi_reduction <add>, %8, %cst_4 [1] : vector<8x256xf32> to vector<8xf32>
    %10 = vector.shape_cast %9 : vector<8xf32> to vector<8x1xf32>
    %c0_5 = arith.constant 0 : index
    %c0_6 = arith.constant 0 : index
    %11 = vector.load %arg3[%c0_5, %c0_6] : memref<8x1xf32, #tpu.memory_space<vmem>>, vector<8x1xf32>
    tpu.vector_store %arg3[%c0_5, %c0_6], %10 {strides = array<i32>} : memref<8x1xf32, #tpu.memory_space<vmem>>, vector<8x1xf32>,
    %cst_7 = arith.constant dense<0x7F800000> : vector<8xf32>
    %12 = vector.multi_reduction <minimumf>, %0, %cst_7 [1] : vector<8x256xf32> to vector<8xf32>
    %13 = vector.shape_cast %12 : vector<8xf32> to vector<8x1xf32>
    %c0_8 = arith.constant 0 : index
    %c0_9 = arith.constant 0 : index
    %14 = vector.load %arg4[%c0_8, %c0_9] : memref<8x1xf32, #tpu.memory_space<vmem>>, vector<8x1xf32>
    tpu.vector_store %arg4[%c0_8, %c0_9], %13 {strides = array<i32>} : memref<8x1xf32, #tpu.memory_space<vmem>>, vector<8x1xf32>,
    %cst_10 = arith.constant dense<0xFF800000> : vector<8xf32>
    %15 = vector.multi_reduction <maximumf>, %0, %cst_10 [1] : vector<8x256xf32> to vector<8xf32>
    %16 = vector.shape_cast %15 : vector<8xf32> to vector<8x1xf32>
    %c0_11 = arith.constant 0 : index
    %c0_12 = arith.constant 0 : index
    %17 = vector.load %arg5[%c0_11, %c0_12] : memref<8x1xf32, #tpu.memory_space<vmem>>, vector<8x1xf32>
    tpu.vector_store %arg5[%c0_11, %c0_12], %16 {strides = array<i32>} : memref<8x1xf32, #tpu.memory_space<vmem>>, vector<8x1xf32>,
    return
  }
  func.func @transform_0(%arg0: i32) -> (i32, i32) {
    %c0_i32 = arith.constant 0 : i32
    %c0_i32_0 = arith.constant 0 : i32
    return %arg0, %c0_i32 : i32, i32
  }
  func.func @transform_1(%arg0: i32) -> (i32, i32) {
    %c0_i32 = arith.constant 0 : i32
    %c0_i32_0 = arith.constant 0 : i32
    return %arg0, %c0_i32 : i32, i32
  }
  func.func @transform_2(%arg0: i32) -> (i32, i32) {
    %c0_i32 = arith.constant 0 : i32
    %c0_i32_0 = arith.constant 0 : i32
    return %arg0, %c0_i32 : i32, i32
  }
  func.func @transform_3(%arg0: i32) -> (i32, i32) {
    %c0_i32 = arith.constant 0 : i32
    %c0_i32_0 = arith.constant 0 : i32
    return %arg0, %c0_i32 : i32, i32
  }
  func.func @transform_4(%arg0: i32) -> (i32, i32) {
    %c0_i32 = arith.constant 0 : i32
    %c0_i32_0 = arith.constant 0 : i32
    return %arg0, %c0_i32 : i32, i32
  }
}

</mosaic_0001>

<llo_original>
// kernel: tpu_custom_call.1
$region0: #{tpu_custom_call.1}
  #allocation0 [shape = 'u32[]', space=smem, size = 0x4, offset = 0x4, fixed_abs, tag = 'smem constant byte address 0x4 - core index']
  #allocation1 [shape = 'u32[144,128]{1,0:T(1,128)}', space=vmem, size = 0x12000, scoped, tag = 'internal scratch']
  %s0 = inlined_call_operand.hbm [shape: f32[8,256], index: 0, kind: input, shape index: {}]
  %s1 = inlined_call_operand.vmem [shape: f32[8,1], index: 1, kind: output, shape index: {0}]
  %s2 = inlined_call_operand.vmem [shape: f32[8,1], index: 2, kind: output, shape index: {1}]
  %s3 = inlined_call_operand.vmem [shape: f32[8,1], index: 3, kind: output, shape index: {2}]
  %s4 = inlined_call_operand.vmem [shape: f32[8,1], index: 4, kind: output, shape index: {3}]
  %5 = xla_tuple %s1, %s2, %s3, %s4
  %s6 = sld [smem:[#allocation0]]
  $region42: #{tpu_custom_call.1} parent=0
    _
  %s8 = ssub.s32 1, %s6
  %s9 = scalar_select 0, %s8, %s6
  $region1: #{tpu_custom_call.1} parent=0
    #allocation2 [shape = 'u8[8192]{0}', space=vmem, size = 0x2000, scoped, tag = 'input window, operand 0, single buffered']
    #allocation3 [shape = 's32[1]{0}', space=sflag, size = 0x4, scoped, tag = 'scoped memory for tpu_custom_call.1']
    %10 = vsyncpa [#allocation3], 0
    // Predicated region
    $region2: #{tpu_custom_call.1} parent=1 // pred_check
      _
    $region3: #{tpu_custom_call.1} parent=1 // pred_check_branch
      %12 = sbr.rel (0) target = $region5
    $region4: #{tpu_custom_call.1} parent=1 // pred_region
      %s14 = ssub.s32 256, 256
      %15 = vsyncadd [#allocation3], %s14
      %s17 = sshll.u32 [#allocation2], 4
      %s18 = int_to_ptr.vmem [resolvable:$true] %s17
      %20 = dma.hbm_to_vmem [thread:$0]  %s0, 256, %s18, [#allocation3]
    $region5: #{tpu_custom_call.1} parent=1 // pred_fallthru
      _
    // Predicated region
    $region6: #{tpu_custom_call.1} parent=1 // pred_check
      _
    $region7: #{tpu_custom_call.1} parent=1 // pred_check_branch
      %22 = sbr.rel (0) target = $region9
    $region8: #{tpu_custom_call.1} parent=1 // pred_region
      %23 = dma.done [#allocation3], 256
    $region9: #{tpu_custom_call.1} parent=1 // pred_fallthru
      _
    %v24 = vld [vmem:[#allocation2] sm:$0xff]
    %v25 = vld [vmem:[#allocation2 + $0x8] sm:$0xff]
    %v26 = vadd.f32 %v24, %v25
    %27 = vadd.xlane.f32.xlu0 %v26
    %v28 = vpop.xlane.xlu0 %27
    %v29 = vrcp.pop 256.0
    %v30 = vmul.f32 %v28, %v29
    %v31 = vsub.f32 %v24, %v30
    %v32 = vsub.f32 %v25, %v30
    %vm33 = vcmask 7168
    %34 = vst.msk [vmem:[%s1] sm:$0xff] %vm33, %v30
    %v35 = vmul.f32 %v31, %v31
    %v36 = vmul.f32 %v32, %v32
    %v37 = vadd.f32 %v35, %v36
    %38 = vadd.xlane.f32.xlu0 %v37
    %v39 = vpop.xlane.xlu0 %38
    %40 = vst.msk [vmem:[%s2] sm:$0xff] %vm33, %v39
    %v41 = vmin.f32 %v24, %v25
    %42 = vmin.xlane.f32.xlu0 %v41
    %v43 = vpop.xlane.xlu0 %42
    %44 = vst.msk [vmem:[%s3] sm:$0xff] %vm33, %v43
    %v45 = vmax.f32 %v24, %v25
    %46 = vmax.xlane.f32.xlu0 %v45
    %v47 = vpop.xlane.xlu0 %46
    %48 = vst.msk [vmem:[%s4] sm:$0xff] %vm33, %v47
    // Predicated region
    $region10: #{tpu_custom_call.1} parent=1 // pred_check
      _
    $region11: #{tpu_custom_call.1} parent=1 // pred_check_branch
      %50 = sbr.rel (0) target = $region13
    $region12: #{tpu_custom_call.1} parent=1 // pred_region
      _
    $region13: #{tpu_custom_call.1} parent=1 // pred_fallthru
      _
    // Predicated region
    $region14: #{tpu_custom_call.1} parent=1 // pred_check
      _
    $region15: #{tpu_custom_call.1} parent=1 // pred_check_branch
      %52 = sbr.rel (0) target = $region17
    $region16: #{tpu_custom_call.1} parent=1 // pred_region
      _
    $region17: #{tpu_custom_call.1} parent=1 // pred_fallthru
      _
    // Predicated region
    $region18: #{tpu_custom_call.1} parent=1 // pred_check
      _
    $region19: #{tpu_custom_call.1} parent=1 // pred_check_branch
      %54 = sbr.rel (0) target = $region21
    $region20: #{tpu_custom_call.1} parent=1 // pred_region
      _
    $region21: #{tpu_custom_call.1} parent=1 // pred_fallthru
      _
    // Predicated region
    $region22: #{tpu_custom_call.1} parent=1 // pred_check
      _
    $region23: #{tpu_custom_call.1} parent=1 // pred_check_branch
      %56 = sbr.rel (0) target = $region25
    $region24: #{tpu_custom_call.1} parent=1 // pred_region
      _
    $region25: #{tpu_custom_call.1} parent=1 // pred_fallthru
      _
    // Predicated region
    $region26: #{tpu_custom_call.1} parent=1 // pred_check
      _
    $region27: #{tpu_custom_call.1} parent=1 // pred_check_branch
      %58 = sbr.rel (0) target = $region29
    $region28: #{tpu_custom_call.1} parent=1 // pred_region
      _
    $region29: #{tpu_custom_call.1} parent=1 // pred_fallthru
      _
    // Predicated region
    $region30: #{tpu_custom_call.1} parent=1 // pred_check
      _
    $region31: #{tpu_custom_call.1} parent=1 // pred_check_branch
      %60 = sbr.rel (0) target = $region33
    $region32: #{tpu_custom_call.1} parent=1 // pred_region
      _
    $region33: #{tpu_custom_call.1} parent=1 // pred_fallthru
      _
    // Predicated region
    $region34: #{tpu_custom_call.1} parent=1 // pred_check
      _
    $region35: #{tpu_custom_call.1} parent=1 // pred_check_branch
      %62 = sbr.rel (0) target = $region37
    $region36: #{tpu_custom_call.1} parent=1 // pred_region
      _
    $region37: #{tpu_custom_call.1} parent=1 // pred_fallthru
      _
    // Predicated region
    $region38: #{tpu_custom_call.1} parent=1 // pred_check
      _
    $region39: #{tpu_custom_call.1} parent=1 // pred_check_branch
      %64 = sbr.rel (0) target = $region41
    $region40: #{tpu_custom_call.1} parent=1 // pred_region
      _
    $region41: #{tpu_custom_call.1} parent=1 // pred_fallthru
      _
    %65 = vsyncpa [#allocation3], 1

</llo_original>
